<compile_context>
chip_gen: v7x
topology: tpu7x:2x2x1
jax: 0.10.0
libtpu: 0.0.40
codegen_flags: <defaults>
</compile_context>

<pallas_src>
import jax
import jax.numpy as jnp
from jax.experimental import pallas as pl
from jax.experimental.pallas import tpu as pltpu


def _bidecoder_kernel(u_ref, i_ref, p_ref, w_ref, o_ref):
    """One edge tile (feature-major).

    u_ref: [D,   tE]  bf16  gathered + transposed user features for this tile
    i_ref: [D,   tE]  bf16  gathered + transposed item features for this tile
    p_ref: [B*D, D ]  bf16  stacked transposed basis matrices (resident, loaded once)
    w_ref: [C,  B*D]  f32   expanded combine weights (resident, loaded once)
    o_ref: [C,   tE]  f32   per-edge class scores, transposed (lane-dense stores)
    """
    d = i_ref.shape[0]
    num_basis = p_ref.shape[0] // d

    # A[b*D + d', e] = sum_d Ps[b, d, d'] * u[e, d]   -- one wide MXU matmul (f32 acc)
    a = jnp.dot(p_ref[...], u_ref[...], preferred_element_type=jnp.float32)   # [B*D, tE]

    # g[b*D + d', e] = A[b*D + d', e] * i[e, d']      -- lane-dense VPU multiply
    iv_rep = jnp.concatenate([i_ref[...]] * num_basis, axis=0)                # [B*D, tE] bf16
    g = a * iv_rep                                                            # promotes to f32

    # out_T[c, e] = sum_{b,d'} Wc[b, c] * g[b*D + d', e]   -- tiny-M MXU matmul
    o_ref[...] = jnp.dot(w_ref[...], g, preferred_element_type=jnp.float32)   # [C, tE]


def bidecoder_forward(ufeat, ifeat, src, dst, Ps, Wc, *,
                      tile_e_max=8192, stream_dtype=jnp.bfloat16):
    """ufeat: [Nu, D], ifeat: [Ni, D], src/dst: [E] int, Ps: [B, D, D], Wc: [B, C].

    Returns [E, C] float32 per-edge class scores (edge-major, like the PyTorch module).
    dropout_rate = 0.0 in the reference module -> dropout is the identity here.
    """
    D = ufeat.shape[-1]
    B, C = Wc.shape
    E = src.shape[0]
    assert Ps.shape == (B, D, D) and ifeat.shape[-1] == D

    # --- one-time parameter preprocessing (tiny; fused by XLA) ----------------
    # P_allT[b*D + d', d] = Ps[b, d, d']   -> single lane-dense MXU LHS for all bases
    P_allT = jnp.transpose(Ps, (0, 2, 1)).reshape(B * D, D).astype(stream_dtype)
    # W_expT[c, b*D + d'] = Wc[b, c]       -> fuses per-edge dot + basis combination
    W_expT = jnp.repeat(Wc.astype(jnp.float32).T, D, axis=1)                   # [C, B*D]

    # --- E-aware edge tiling: big tiles, but >= 2 grid steps for megacore -----
    LANE = 128

    def _round_up(x, m):
        return ((x + m - 1) // m) * m

    e_lane = _round_up(max(E, 1), LANE)
    nsteps = max(pl.cdiv(e_lane, tile_e_max), 2 if e_lane >= 2 * LANE else 1)
    tile_e = _round_up(pl.cdiv(e_lane, nsteps), LANE)
    E_pad = _round_up(E, tile_e)
    grid = (E_pad // tile_e,)

    # --- gather -> cast -> transpose -> pad (single fused producer under jit) --
    # HBM traffic is dominated by the two [D, E] edge slabs -> stream them as bf16.
    # TODO(synk): for very large edge sets, fuse this endpoint gather into the kernel
    # (node tables resident in VMEM + per-tile int32 index blocks) to cut HBM traffic
    # from ~128 B/edge to ~8 B/edge of indices.
    pad = E_pad - E
    uT = jnp.pad(ufeat.astype(stream_dtype)[src].T, ((0, 0), (0, pad)))        # [D, E_pad]
    iT = jnp.pad(ifeat.astype(stream_dtype)[dst].T, ((0, 0), (0, pad)))        # [D, E_pad]

    out_t = pl.pallas_call(
        _bidecoder_kernel,
        out_shape=jax.ShapeDtypeStruct((C, E_pad), jnp.float32),
        grid_spec=pltpu.PrefetchScalarGridSpec(
            num_scalar_prefetch=0,
            grid=grid,
            in_specs=[
                pl.BlockSpec((D, tile_e), lambda e: (0, e)),      # uT tile (bf16)
                pl.BlockSpec((D, tile_e), lambda e: (0, e)),      # iT tile (bf16)
                pl.BlockSpec((B * D, D), lambda e: (0, 0)),       # stacked bases (resident)
                pl.BlockSpec((C, B * D), lambda e: (0, 0)),       # combine weights (resident)
            ],
            out_specs=pl.BlockSpec((C, tile_e), lambda e: (0, e)),
        ),
        compiler_params=pltpu.CompilerParams(
            # edge axis is fully parallel -> v7x megacore shards the >=2 tiles across TCs
            dimension_semantics=("parallel",),
            # safe on v5e/v6e (128 MiB) and under the v7x 64 MiB physical cap
            vmem_limit_bytes=48 * 1024 * 1024,
        ),
    )(uT, iT, P_allT, W_expT)

    # Drop padded edge columns and return edge-major [E, C] like the module.
    return out_t[:, :E].T


def _xavier_uniform(key, shape):
    fan_in, fan_out = shape[-2], shape[-1]
    limit = (6.0 / (fan_in + fan_out)) ** 0.5
    return jax.random.uniform(key, shape, jnp.float32, -limit, limit)


if __name__ == "__main__":
    # small, module-consistent shapes
    in_units = 32     # feature dim D
    num_classes = 5
    num_basis = 2
    n_users = 8
    n_movies = 8
    n_edges = 16

    key = jax.random.PRNGKey(0)
    k_u, k_i, k_p, k_w, k_src, k_dst = jax.random.split(key, 6)

    ufeat = jax.random.normal(k_u, (n_users, in_units), jnp.float32)
    ifeat = jax.random.normal(k_i, (n_movies, in_units), jnp.float32)

    # parameters (deterministic xavier-uniform init, like reset_parameters)
    Ps = _xavier_uniform(k_p, (num_basis, in_units, in_units))   # ParameterList of P_i
    W_linear = _xavier_uniform(k_w, (num_classes, num_basis))    # nn.Linear weight [out, in]
    Wc = W_linear.T                                              # [num_basis, num_classes]

    # graph edges user -> movie
    src = jax.random.randint(k_src, (n_edges,), 0, n_users)
    dst = jax.random.randint(k_dst, (n_edges,), 0, n_movies)

    fwd = jax.jit(bidecoder_forward)
    out = jax.block_until_ready(fwd(ufeat, ifeat, src, dst, Ps, Wc))

    # --- references ----------------------------------------------------------
    u_edge = ufeat[src]   # [E, D]
    i_edge = ifeat[dst]   # [E, D]

    # (1) bf16-quantized streaming inputs -> tight check of the fused kernel math
    u_q = u_edge.astype(jnp.bfloat16).astype(jnp.float32)
    i_q = i_edge.astype(jnp.bfloat16).astype(jnp.float32)
    P_q = Ps.astype(jnp.bfloat16).astype(jnp.float32)
    sr_q = jnp.stack(
        [jnp.sum((u_q @ P_q[b]) * i_q, axis=-1) for b in range(num_basis)],
        axis=-1)                                                 # [E, B]
    ref_q = sr_q @ Wc                                            # [E, C]

    # (2) full-f32 reference -> semantic sanity (looser: bf16 input streaming)
    sr_f = jnp.stack(
        [jnp.sum((u_edge @ Ps[b]) * i_edge, axis=-1) for b in range(num_basis)],
        axis=-1)
    ref_f = sr_f @ Wc

    assert out.shape == (n_edges, num_classes)
    assert jnp.allclose(out, ref_q, atol=2e-3, rtol=2e-3), (out, ref_q)
    assert jnp.allclose(out, ref_f, atol=1e-1, rtol=1e-1), (out, ref_f)

    print("KERNEL_OK")
</pallas_src>

<mosaic_0001>
module attributes {stable_mosaic.version = 11 : i64} {
  func.func @_bidecoder_kernel(%arg0: i32, %arg1: memref<32x128xbf16, #tpu.memory_space<vmem>>, %arg2: memref<32x128xbf16, #tpu.memory_space<vmem>>, %arg3: memref<64x32xbf16, #tpu.memory_space<vmem>>, %arg4: memref<5x64xf32, #tpu.memory_space<vmem>>, %arg5: memref<5x128xf32, #tpu.memory_space<vmem>>) attributes {dimension_semantics = [#tpu.dimension_semantics<parallel>], iteration_bounds = array<i64: 1>, scalar_prefetch = 0 : i64, scratch_operands = 0 : i64, tpu.core_type = #tpu.core_type<tc>, window_params = [{transform_indices = @transform_0, window_bounds = array<i64: 32, 128>}, {transform_indices = @transform_1, window_bounds = array<i64: 32, 128>}, {pipeline_mode = #tpu.pipeline_mode<synchronous>, transform_indices = @transform_2, window_bounds = array<i64: 64, 32>}, {pipeline_mode = #tpu.pipeline_mode<synchronous>, transform_indices = @transform_3, window_bounds = array<i64: 5, 64>}, {transform_indices = @transform_4, window_bounds = array<i64: 5, 128>}]} {
    %c0 = arith.constant 0 : index
    %c0_0 = arith.constant 0 : index
    %0 = vector.load %arg3[%c0, %c0_0] : memref<64x32xbf16, #tpu.memory_space<vmem>>, vector<64x32xbf16>
    %c0_1 = arith.constant 0 : index
    %c0_2 = arith.constant 0 : index
    %1 = vector.load %arg1[%c0_1, %c0_2] : memref<32x128xbf16, #tpu.memory_space<vmem>>, vector<32x128xbf16>
    %cst = arith.constant dense<0.000000e+00> : vector<64x128xf32>
    %2 = tpu.matmul %0, %1, %cst {dimension_numbers = #tpu.dot_dimension_numbers<[1], [0], [0], [1], [0, 0, 1, 1], [], []>} : vector<64x32xbf16>, vector<32x128xbf16>, vector<64x128xf32> -> vector<64x128xf32>
    %c0_3 = arith.constant 0 : index
    %c0_4 = arith.constant 0 : index
    %3 = vector.load %arg2[%c0_3, %c0_4] : memref<32x128xbf16, #tpu.memory_space<vmem>>, vector<32x128xbf16>
    %4 = tpu.concatenate %3, %3 in 0 : vector<32x128xbf16>, vector<32x128xbf16> -> vector<64x128xbf16>
    %5 = arith.extf %4 : vector<64x128xbf16> to vector<64x128xf32>
    %6 = arith.mulf %2, %5 : vector<64x128xf32>
    %c0_5 = arith.constant 0 : index
    %c0_6 = arith.constant 0 : index
    %7 = vector.load %arg4[%c0_5, %c0_6] : memref<5x64xf32, #tpu.memory_space<vmem>>, vector<5x64xf32>
    %cst_7 = arith.constant dense<0.000000e+00> : vector<5x128xf32>
    %8 = tpu.matmul %7, %6, %cst_7 {dimension_numbers = #tpu.dot_dimension_numbers<[1], [0], [0], [1], [0, 0, 1, 1], [], []>} : vector<5x64xf32>, vector<64x128xf32>, vector<5x128xf32> -> vector<5x128xf32>
    %c0_8 = arith.constant 0 : index
    %c0_9 = arith.constant 0 : index
    %9 = vector.load %arg5[%c0_8, %c0_9] : memref<5x128xf32, #tpu.memory_space<vmem>>, vector<5x128xf32>
    tpu.vector_store %arg5[%c0_8, %c0_9], %8 {strides = array<i32>} : memref<5x128xf32, #tpu.memory_space<vmem>>, vector<5x128xf32>,
    return
  }
  func.func @transform_0(%arg0: i32) -> (i32, i32) {
    %c0_i32 = arith.constant 0 : i32
    %c0_i32_0 = arith.constant 0 : i32
    return %c0_i32, %arg0 : i32, i32
  }
  func.func @transform_1(%arg0: i32) -> (i32, i32) {
    %c0_i32 = arith.constant 0 : i32
    %c0_i32_0 = arith.constant 0 : i32
    return %c0_i32, %arg0 : i32, i32
  }
  func.func @transform_2(%arg0: i32) -> (i32, i32) {
    %c0_i32 = arith.constant 0 : i32
    %c0_i32_0 = arith.constant 0 : i32
    %c0_i32_1 = arith.constant 0 : i32
    return %c0_i32, %c0_i32_0 : i32, i32
  }
  func.func @transform_3(%arg0: i32) -> (i32, i32) {
    %c0_i32 = arith.constant 0 : i32
    %c0_i32_0 = arith.constant 0 : i32
    %c0_i32_1 = arith.constant 0 : i32
    return %c0_i32, %c0_i32_0 : i32, i32
  }
  func.func @transform_4(%arg0: i32) -> (i32, i32) {
    %c0_i32 = arith.constant 0 : i32
    %c0_i32_0 = arith.constant 0 : i32
    return %c0_i32, %arg0 : i32, i32
  }
}

</mosaic_0001>

<llo_original>
// kernel: bidecoder_forward.1
$region0: #{bidecoder_forward.1}
  #allocation0 [shape = 'u32[]', space=smem, size = 0x4, offset = 0x4, fixed_abs, tag = 'smem constant byte address 0x4 - core index']
  #allocation1 [shape = 'u32[144,128]{1,0:T(1,128)}', space=vmem, size = 0x12000, scoped, tag = 'internal scratch']
  %s0 = inlined_call_operand.vmem [shape: bf16[32,128], index: 0, kind: input, shape index: {}]
  %s1 = inlined_call_operand.vmem [shape: bf16[32,128], index: 1, kind: input, shape index: {}]
  %s2 = inlined_call_operand.vmem [shape: bf16[64,32], index: 2, kind: input, shape index: {}]
  %s3 = inlined_call_operand.vmem [shape: f32[5,64], index: 3, kind: input, shape index: {}]
  %s4 = inlined_call_operand.vmem [shape: f32[5,128], index: 4, kind: output, shape index: {}]
  %s5 = sld [smem:[#allocation0]]
  $region26: #{bidecoder_forward.1} parent=0
    _
  %s7 = ssub.s32 1, %s5
  %s8 = scalar_select 0, %s7, %s5
  // Predicated region
  $region2: #{bidecoder_forward.1} parent=0 // pred_check
    _
  $region3: #{bidecoder_forward.1} parent=0 // pred_check_branch
    %10 = sbr.rel (0) target = $region5
  $region4: #{bidecoder_forward.1} parent=0 // pred_region
    _
  $region5: #{bidecoder_forward.1} parent=0 // pred_fallthru
    _
  // Predicated region
  $region6: #{bidecoder_forward.1} parent=0 // pred_check
    _
  $region7: #{bidecoder_forward.1} parent=0 // pred_check_branch
    %12 = sbr.rel (0) target = $region9
  $region8: #{bidecoder_forward.1} parent=0 // pred_region
    _
  $region9: #{bidecoder_forward.1} parent=0 // pred_fallthru
    _
  // Predicated region
  $region10: #{bidecoder_forward.1} parent=0 // pred_check
    _
  $region11: #{bidecoder_forward.1} parent=0 // pred_check_branch
    %14 = sbr.rel (0) target = $region13
  $region12: #{bidecoder_forward.1} parent=0 // pred_region
    _
  $region13: #{bidecoder_forward.1} parent=0 // pred_fallthru
    _
  // Predicated region
  $region14: #{bidecoder_forward.1} parent=0 // pred_check
    _
  $region15: #{bidecoder_forward.1} parent=0 // pred_check_branch
    %16 = sbr.rel (0) target = $region17
  $region16: #{bidecoder_forward.1} parent=0 // pred_region
    _
  $region17: #{bidecoder_forward.1} parent=0 // pred_fallthru
    _
  %v18 = vld [vmem:[%s2] sm:$0xf]
  %v19 = vld [vmem:[%s2 + $0x4] sm:$0xf]
  %v20 = vld [vmem:[%s2 + $0x8] sm:$0xf]
  %v21 = vld [vmem:[%s2 + $0xc] sm:$0xf]
  %v22 = vld [vmem:[%s2 + $0x10] sm:$0xf]
  %v23 = vld [vmem:[%s2 + $0x14] sm:$0xf]
  %v24 = vld [vmem:[%s2 + $0x18] sm:$0xf]
  %v25 = vld [vmem:[%s2 + $0x1c] sm:$0xf]
  %v26 = vld [vmem:[%s0] sm:$0xf]
  %v27 = vld [vmem:[%s0 + $0x4] sm:$0xf]
  %v28 = vld [vmem:[%s0 + $0x8] sm:$0xf]
  %v29 = vld [vmem:[%s0 + $0xc] sm:$0xf]
  %v38 = vunpack.c.l.b16 %v18
  %v39 = vunpack.c.l.b16 %v19
  %v40 = vunpack.c.l.b16 %v20
  %v41 = vunpack.c.l.b16 %v21
  %v42 = vunpack.c.l.b16 %v22
  %v43 = vunpack.c.l.b16 %v23
  %v44 = vunpack.c.l.b16 %v24
  %v45 = vunpack.c.l.b16 %v25
  %v46 = vpack.c.b16 %v39, %v38
  %v47 = vpack.c.b16 %v41, %v40
  %v48 = vpack.c.b16 %v43, %v42
  %v49 = vpack.c.b16 %v45, %v44
  %v54 = vunpack.c.l.b16 %v26
  %v55 = vunpack.c.l.b16 %v27
  %v56 = vunpack.c.l.b16 %v28
  %v57 = vunpack.c.l.b16 %v29
  %v58 = vpack.c.b16 %v55, %v54
  %v59 = vpack.c.b16 %v57, %v56
  %vm62 = vcmask 261120
  %v64 = vsel %vm62, %v46, 0
  %v67 = vsel %vm62, %v47, 0
  %v70 = vsel %vm62, %v48, 0
  %v73 = vsel %vm62, %v49, 0
  %75 = vmatprep.subr.bf16.mxu0 0
  %76 = vmatpush1.bf16.msra.mxu0 %v58
  %77 = vmatprep.subr.bf16.mxu0 0
  %78 = vmatpush1.bf16.msra.mxu0 %v59
  %79 = vmatprep.subr.bf16.mxu0 0
  %80 = vmatpush1.bf16.msra.mxu0 0
  %81 = vmatprep.subr.bf16.mxu0 0
  %82 = vmatpush1.bf16.msra.mxu0 0
  %83 = vmatprep.subr.bf16.mxu0 0
  %84 = vmatpush1.bf16.msra.mxu0 0
  %85 = vmatprep.subr.bf16.mxu0 0
  %86 = vmatpush1.bf16.msra.mxu0 0
  %87 = vmatprep.subr.bf16.mxu0 0
  %88 = vmatpush1.bf16.msra.mxu0 0
  %89 = vmatprep.subr.bf16.mxu0 0
  %90 = vmatpush1.bf16.msra.mxu0 0
  %91 = vmatprep.subr.bf16.mxu0 0
  %92 = vmatpush1.bf16.msra.mxu0 0
  %93 = vmatprep.subr.bf16.mxu0 0
  %94 = vmatpush1.bf16.msra.mxu0 0
  %95 = vmatprep.subr.bf16.mxu0 0
  %96 = vmatpush1.bf16.msra.mxu0 0
  %97 = vmatprep.subr.bf16.mxu0 0
  %98 = vmatpush1.bf16.msra.mxu0 0
  %99 = vmatprep.subr.bf16.mxu0 0
  %100 = vmatpush1.bf16.msra.mxu0 0
  %101 = vmatprep.subr.bf16.mxu0 0
  %102 = vmatpush1.bf16.msra.mxu0 0
  %103 = vmatprep.subr.bf16.mxu0 0
  %104 = vmatpush1.bf16.msra.mxu0 0
  %105 = vmatprep.subr.bf16.mxu0 0
  %106 = vmatpush1.bf16.msra.mxu0 0
  %107 = vmatprep.mubr.bf16.mxu0 0
  %108 = vmatmul.mubr.bf16.gmra.mrb[0].mxu0 %v64
  %v109 = vpop.f32.mrb[0].mxu0
  %v110 = vadd.f32 0.0, %v109
  %v111 = vpop.f32.mrb[0].mxu0
  %v112 = vpop.f32.mrb[0].mxu0
  %v113 = vadd.f32 0.0, %v112
  %v114 = vpop.f32.mrb[0].mxu0
  %115 = vmatprep.mubr.bf16.mxu0 0
  %116 = vmatmul.mubr.bf16.gmra.mrb[0].mxu0 %v67
  %v117 = vpop.f32.mrb[0].mxu0
  %v118 = vadd.f32 0.0, %v117
  %v119 = vpop.f32.mrb[0].mxu0
  %v120 = vpop.f32.mrb[0].mxu0
  %v121 = vadd.f32 0.0, %v120
  %v122 = vpop.f32.mrb[0].mxu0
  %123 = vmatprep.mubr.bf16.mxu0 0
  %124 = vmatmul.mubr.bf16.gmra.mrb[0].mxu0 %v70
  %v125 = vpop.f32.mrb[0].mxu0
  %v126 = vadd.f32 0.0, %v125
  %v127 = vpop.f32.mrb[0].mxu0
  %v128 = vpop.f32.mrb[0].mxu0
  %v129 = vadd.f32 0.0, %v128
  %v130 = vpop.f32.mrb[0].mxu0
  %131 = vmatprep.mubr.bf16.mxu0 0
  %132 = vmatmul.mubr.bf16.gmra.mrb[0].mxu0 %v73
  %v133 = vpop.f32.mrb[0].mxu0
  %v134 = vadd.f32 0.0, %v133
  %v135 = vpop.f32.mrb[0].mxu0
  %v136 = vpop.f32.mrb[0].mxu0
  %v137 = vadd.f32 0.0, %v136
  %v138 = vpop.f32.mrb[0].mxu0
  %139 = vdwg.mxu0
  %v140 = vld [vmem:[%s1] sm:$0xf]
  %v141 = vld [vmem:[%s1 + $0x4] sm:$0xf]
  %v142 = vld [vmem:[%s1 + $0x8] sm:$0xf]
  %v143 = vld [vmem:[%s1 + $0xc] sm:$0xf]
  %v148 = vunpack.c.l.b16 %v140
  %v149 = vunpack.c.l.b16 %v141
  %v150 = vunpack.c.l.b16 %v142
  %v151 = vunpack.c.l.b16 %v143
  %v152 = vpack.c.b16 %v149, %v148
  %v153 = vpack.c.b16 %v151, %v150
  %v156 = vunpack.c.l.bf16 %v152
  %v157 = vunpack.c.h.bf16 %v152
  %v158 = vunpack.c.l.bf16 %v153
  %v159 = vunpack.c.h.bf16 %v153
  %v160 = vmul.f32 %v110, %v156
  %v161 = vmul.f32 %v113, %v157
  %v162 = vmul.f32 %v118, %v158
  %v163 = vmul.f32 %v121, %v159
  %v164 = vmul.f32 %v126, %v156
  %v165 = vmul.f32 %v129, %v157
  %v166 = vmul.f32 %v134, %v158
  %v167 = vmul.f32 %v137, %v159
  %v168 = vld [vmem:[%s3] sm:$0x1f]
  %vm169 = vcmask 523264
  %v171 = vsel %vm169, %v168, 0
  %173 = vmatprep.subr.mxu0 0.0
  %174 = vmatpush1.msra.mxu0 %v160
  %175 = vmatprep.subr.mxu0 0.0
  %176 = vmatpush1.msra.mxu0 %v161
  %177 = vmatprep.subr.mxu0 0.0
  %178 = vmatpush1.msra.mxu0 %v162
  %179 = vmatprep.subr.mxu0 0.0
  %180 = vmatpush1.msra.mxu0 %v163
  %181 = vmatprep.subr.mxu0 0.0
  %182 = vmatpush1.msra.mxu0 %v164
  %183 = vmatprep.subr.mxu0 0.0
  %184 = vmatpush1.msra.mxu0 %v165
  %185 = vmatprep.subr.mxu0 0.0
  %186 = vmatpush1.msra.mxu0 %v166
  %187 = vmatprep.subr.mxu0 0.0
  %188 = vmatpush1.msra.mxu0 %v167
  %189 = vmatprep.subr.mxu0 0.0
  %190 = vmatpush1.msra.mxu0 0.0
  %191 = vmatprep.subr.mxu0 0.0
  %192 = vmatpush1.msra.mxu0 0.0
  %193 = vmatprep.subr.mxu0 0.0
  %194 = vmatpush1.msra.mxu0 0.0
  %195 = vmatprep.subr.mxu0 0.0
  %196 = vmatpush1.msra.mxu0 0.0
  %197 = vmatprep.subr.mxu0 0.0
  %198 = vmatpush1.msra.mxu0 0.0
  %199 = vmatprep.subr.mxu0 0.0
  %200 = vmatpush1.msra.mxu0 0.0
  %201 = vmatprep.subr.mxu0 0.0
  %202 = vmatpush1.msra.mxu0 0.0
  %203 = vmatprep.subr.mxu0 0.0
  %204 = vmatpush1.msra.mxu0 0.0
  %205 = vmatprep.subr.mxu0 0.0
  %206 = vmatpush1.msra.mxu0 0.0
  %207 = vmatprep.subr.mxu0 0.0
  %208 = vmatpush1.msra.mxu0 0.0
  %209 = vmatprep.subr.mxu0 0.0
  %210 = vmatpush1.msra.mxu0 0.0
  %211 = vmatprep.subr.mxu0 0.0
  %212 = vmatpush1.msra.mxu0 0.0
  %213 = vmatprep.subr.mxu0 0.0
  %214 = vmatpush1.msra.mxu0 0.0
  %215 = vmatprep.subr.mxu0 0.0
  %216 = vmatpush1.msra.mxu0 0.0
  %217 = vmatprep.subr.mxu0 0.0
  %218 = vmatpush1.msra.mxu0 0.0
  %219 = vmatprep.subr.mxu0 0.0
  %220 = vmatpush1.msra.mxu0 0.0
  %221 = vmatprep.subr.mxu0 0.0
  %222 = vmatpush1.msra.mxu0 0.0
  %223 = vmatprep.subr.mxu0 0.0
  %224 = vmatpush1.msra.mxu0 0.0
  %225 = vmatprep.subr.mxu0 0.0
  %226 = vmatpush1.msra.mxu0 0.0
  %227 = vmatprep.subr.mxu0 0.0
  %228 = vmatpush1.msra.mxu0 0.0
  %229 = vmatprep.subr.mxu0 0.0
  %230 = vmatpush1.msra.mxu0 0.0
  %231 = vmatprep.subr.mxu0 0.0
  %232 = vmatpush1.msra.mxu0 0.0
  %233 = vmatprep.subr.mxu0 0.0
  %234 = vmatpush1.msra.mxu0 0.0
  %235 = vmatprep.subr.mxu0 0.0
  %236 = vmatpush1.msra.mxu0 0.0
  %237 = vmatprep.mubr.f32.mxu0 0.0
  %238 = vmatmul.mubr.f32.gmra.mrb[0].mxu0 %v171
  %v239 = vpop.f32.mrb[0].mxu0
  %v240 = vadd.f32 0.0, %v239
  %v241 = vpop.f32.mrb[0].mxu0
  %242 = vdwg.mxu0
  %243 = vst [vmem:[%s4] sm:$0x1f] %v240
  // Predicated region
  $region18: #{bidecoder_forward.1} parent=0 // pred_check
    _
  $region19: #{bidecoder_forward.1} parent=0 // pred_check_branch
    %245 = sbr.rel (0) target = $region21
  $region20: #{bidecoder_forward.1} parent=0 // pred_region
    _
  $region21: #{bidecoder_forward.1} parent=0 // pred_fallthru
    _
  // Predicated region
  $region22: #{bidecoder_forward.1} parent=0 // pred_check
    _
  $region23: #{bidecoder_forward.1} parent=0 // pred_check_branch
    %247 = sbr.rel (0) target = $region25
  $region24: #{bidecoder_forward.1} parent=0 // pred_region
    _
  $region25: #{bidecoder_forward.1} parent=0 // pred_fallthru
    _

</llo_original>
